<compile_context>
chip_gen: v7x
topology: tpu7x:2x2x1
jax: 0.10.0
libtpu: 0.0.40
codegen_flags: <defaults>
</compile_context>

<pallas_src>
import math
from functools import partial

import jax
import jax.numpy as jnp
from jax.experimental import pallas as pl
from jax.experimental.pallas import tpu as pltpu


# ----------------------------- Pallas kernels -----------------------------

def _kv_proj_kernel(src_ref, val_ref, wk_ref, bk_ref, wv_ref, bv_ref,
                    k_ref, v_ref, *, compute_dtype):
    # src/val: (ts, d_llm_2), wk/wv: (d_llm_2, dk) resident, bk/bv: (1, dk)
    wk = wk_ref[...].astype(compute_dtype)
    wv = wv_ref[...].astype(compute_dtype)
    k_ref[...] = (jnp.dot(src_ref[...].astype(compute_dtype), wk,
                          preferred_element_type=jnp.float32) + bk_ref[...])
    v_ref[...] = (jnp.dot(val_ref[...].astype(compute_dtype), wv,
                          preferred_element_type=jnp.float32) + bv_ref[...])


def _fused_attn_kernel(x_ref, wq_ref, bq_ref, k_ref, v_ref, wo_ref, bo_ref,
                       o_ref, *, n_heads, scale, compute_dtype):
    # x: (tm, d_model); wq: (d_model, dk); k/v: (S, dk); wo: (dk, d_llm)
    # Q projection, scale folded into Q (cheaper than scaling (L, S) scores).
    q = (jnp.dot(x_ref[...].astype(compute_dtype),
                 wq_ref[...].astype(compute_dtype),
                 preferred_element_type=jnp.float32) + bq_ref[...]) * scale
    k = k_ref[...]
    v = v_ref[...]
    dk = q.shape[-1]
    E = dk // n_heads

    ctx = []
    for h in range(n_heads):                       # static loop, H is small
        q_h = q[:, h * E:(h + 1) * E].astype(compute_dtype)   # (tm, E)
        k_h = k[:, h * E:(h + 1) * E].astype(compute_dtype)   # (S,  E)
        v_h = v[:, h * E:(h + 1) * E].astype(compute_dtype)   # (S,  E)
        # scores: contract the last dims directly -> MXU, no k.T transpose.
        s = jax.lax.dot_general(q_h, k_h, (((1,), (1,)), ((), ())),
                                preferred_element_type=jnp.float32)  # (tm, S)
        m = jnp.max(s, axis=-1, keepdims=True)
        p = jnp.exp(s - m)
        denom = jnp.sum(p, axis=-1, keepdims=True)
        attn = p * pl.reciprocal(denom, approx=True)
        # TODO(synk): attention dropout omitted (identity at inference).
        # TODO(synk): for very large S (~1000s of prototypes) tile S with an
        # online-softmax accumulator instead of the full (tm, S) scores block.
        ctx.append(jnp.dot(attn.astype(compute_dtype), v_h,
                           preferred_element_type=jnp.float32))      # (tm, E)

    # Head-concatenated, lane-dense context == einsum('bhls,she->blhe')+reshape.
    ctx = jnp.concatenate(ctx, axis=-1)                              # (tm, dk)
    o_ref[...] = (jnp.dot(ctx.astype(compute_dtype),
                          wo_ref[...].astype(compute_dtype),
                          preferred_element_type=jnp.float32) + bo_ref[...])


# ----------------------------- Module wrapper ------------------------------

def init_params(key, d_model, n_heads, d_llm, d_llm_2=768, d_keys=None):
    d_keys = d_keys or d_model // n_heads
    dk = d_keys * n_heads
    ks = jax.random.split(key, 8)

    def lin_init(kw, kb, fan_in, fan_out):
        bound = 1.0 / math.sqrt(fan_in)
        w = jax.random.uniform(kw, (fan_in, fan_out), jnp.float32, -bound, bound)
        b = jax.random.uniform(kb, (fan_out,), jnp.float32, -bound, bound)
        return w, b

    wq, bq = lin_init(ks[0], ks[1], d_model, dk)
    wk, bk = lin_init(ks[2], ks[3], d_llm_2, dk)
    wv, bv = lin_init(ks[4], ks[5], d_llm_2, dk)
    wo, bo = lin_init(ks[6], ks[7], dk, d_llm)
    return dict(wq=wq, bq=bq, wk=wk, bk=bk, wv=wv, bv=bv, wo=wo, bo=bo)


def _row_tile(n, cap):
    # cap is a multiple of 8; remainder rows are handled by Pallas padding.
    return n if n <= cap else cap


def reprogramming_layer_forward(params, target_embedding, source_embedding,
                                value_embedding, n_heads,
                                compute_dtype=jnp.float32):
    B, L, d_model = target_embedding.shape
    S, d_src = source_embedding.shape
    dk = params["wq"].shape[1]
    d_llm = params["wo"].shape[1]
    E = dk // n_heads
    scale = 1.0 / math.sqrt(E)

    # ---- Stage 1: fused K/V projections (one call, two outputs) ----
    ts = _row_tile(S, 512)
    k_proj, v_proj = pl.pallas_call(
        partial(_kv_proj_kernel, compute_dtype=compute_dtype),
        out_shape=(jax.ShapeDtypeStruct((S, dk), jnp.float32),
                   jax.ShapeDtypeStruct((S, dk), jnp.float32)),
        grid=(pl.cdiv(S, ts),),
        in_specs=[
            pl.BlockSpec((ts, d_src), lambda i: (i, 0)),
            pl.BlockSpec((ts, d_src), lambda i: (i, 0)),
            pl.BlockSpec((d_src, dk), lambda i: (0, 0)),   # Wk resident
            pl.BlockSpec((1, dk), lambda i: (0, 0)),       # bk resident
            pl.BlockSpec((d_src, dk), lambda i: (0, 0)),   # Wv resident
            pl.BlockSpec((1, dk), lambda i: (0, 0)),       # bv resident
        ],
        out_specs=(pl.BlockSpec((ts, dk), lambda i: (i, 0)),
                   pl.BlockSpec((ts, dk), lambda i: (i, 0))),
        compiler_params=pltpu.CompilerParams(
            dimension_semantics=("parallel",)),
    )(source_embedding, value_embedding,
      params["wk"], params["bk"].reshape(1, dk),
      params["wv"], params["bv"].reshape(1, dk))

    # ---- Stage 2: fused Q-projection + attention + output projection ----
    M = B * L
    x = target_embedding.reshape(M, d_model)
    tm = _row_tile(M, 256)
    out = pl.pallas_call(
        partial(_fused_attn_kernel, n_heads=n_heads, scale=scale,
                compute_dtype=compute_dtype),
        out_shape=jax.ShapeDtypeStruct((M, d_llm), jnp.float32),
        grid=(pl.cdiv(M, tm),),
        in_specs=[
            pl.BlockSpec((tm, d_model), lambda i: (i, 0)),  # target row tile
            pl.BlockSpec((d_model, dk), lambda i: (0, 0)),  # Wq resident
            pl.BlockSpec((1, dk), lambda i: (0, 0)),        # bq resident
            pl.BlockSpec((S, dk), lambda i: (0, 0)),        # K resident
            pl.BlockSpec((S, dk), lambda i: (0, 0)),        # V resident
            pl.BlockSpec((dk, d_llm), lambda i: (0, 0)),    # Wo resident
            pl.BlockSpec((1, d_llm), lambda i: (0, 0)),     # bo resident
        ],
        out_specs=pl.BlockSpec((tm, d_llm), lambda i: (i, 0)),
        compiler_params=pltpu.CompilerParams(
            dimension_semantics=("parallel",)),
    )(x, params["wq"], params["bq"].reshape(1, dk), k_proj, v_proj,
      params["wo"], params["bo"].reshape(1, d_llm))

    return out.reshape(B, L, d_llm)


def reference_forward(params, target, source, value, n_heads):
    B, L, _ = target.shape
    S, _ = source.shape
    H = n_heads
    q = target @ params["wq"] + params["bq"]
    k = source @ params["wk"] + params["bk"]
    v = value @ params["wv"] + params["bv"]
    E = q.shape[-1] // H
    q = q.reshape(B, L, H, E)
    k = k.reshape(S, H, E)
    v = v.reshape(S, H, E)
    scale = 1.0 / math.sqrt(E)
    scores = jnp.einsum("blhe,she->bhls", q, k)
    A = jax.nn.softmax(scale * scores, axis=-1)
    out = jnp.einsum("bhls,she->blhe", A, v).reshape(B, L, H * E)
    return out @ params["wo"] + params["bo"]


if __name__ == "__main__":
    # small shapes consistent with the module
    d_model, n_heads, d_llm, d_llm_2 = 32, 4, 96, 768
    B, L, S = 2, 8, 16

    key = jax.random.PRNGKey(0)
    kp, kt, ks_, kv = jax.random.split(key, 4)

    params = init_params(kp, d_model, n_heads, d_llm, d_llm_2)
    target_embedding = jax.random.normal(kt, (B, L, d_model), jnp.float32)
    source_embedding = jax.random.normal(ks_, (S, d_llm_2), jnp.float32)
    value_embedding = jax.random.normal(kv, (S, d_llm_2), jnp.float32)

    ref = reference_forward(params, target_embedding, source_embedding,
                            value_embedding, n_heads)

    # f32 MXU operands (tight check; approx reciprocal in softmax).
    out_f32 = reprogramming_layer_forward(
        params, target_embedding, source_embedding, value_embedding, n_heads,
        compute_dtype=jnp.float32)
    out_f32 = jax.block_until_ready(out_f32)
    assert out_f32.shape == (B, L, d_llm), out_f32.shape
    assert jnp.allclose(out_f32, ref, atol=1e-2, rtol=1e-2), \
        float(jnp.max(jnp.abs(out_f32 - ref)))

    # bf16 MXU operands with f32 accumulation (v5e/v6e/v7x perf path).
    out_bf16 = reprogramming_layer_forward(
        params, target_embedding, source_embedding, value_embedding, n_heads,
        compute_dtype=jnp.bfloat16)
    out_bf16 = jax.block_until_ready(out_bf16)
    assert jnp.allclose(out_bf16, ref, atol=1e-1, rtol=1e-1), \
        float(jnp.max(jnp.abs(out_bf16 - ref)))

    print("KERNEL_OK")
</pallas_src>

<mosaic_0001>
module attributes {stable_mosaic.version = 11 : i64} {
  func.func @_kv_proj_kernel(%arg0: i32, %arg1: memref<16x768xf32, #tpu.memory_space<vmem>>, %arg2: memref<16x768xf32, #tpu.memory_space<vmem>>, %arg3: memref<768x32xf32, #tpu.memory_space<vmem>>, %arg4: memref<1x32xf32, #tpu.memory_space<vmem>>, %arg5: memref<768x32xf32, #tpu.memory_space<vmem>>, %arg6: memref<1x32xf32, #tpu.memory_space<vmem>>, %arg7: memref<16x32xf32, #tpu.memory_space<vmem>>, %arg8: memref<16x32xf32, #tpu.memory_space<vmem>>) attributes {dimension_semantics = [#tpu.dimension_semantics<parallel>], iteration_bounds = array<i64: 1>, scalar_prefetch = 0 : i64, scratch_operands = 0 : i64, tpu.core_type = #tpu.core_type<tc>, window_params = [{transform_indices = @transform_0, window_bounds = array<i64: 16, 768>}, {transform_indices = @transform_1, window_bounds = array<i64: 16, 768>}, {pipeline_mode = #tpu.pipeline_mode<synchronous>, transform_indices = @transform_2, window_bounds = array<i64: 768, 32>}, {pipeline_mode = #tpu.pipeline_mode<synchronous>, transform_indices = @transform_3, window_bounds = array<i64: 1, 32>}, {pipeline_mode = #tpu.pipeline_mode<synchronous>, transform_indices = @transform_4, window_bounds = array<i64: 768, 32>}, {pipeline_mode = #tpu.pipeline_mode<synchronous>, transform_indices = @transform_5, window_bounds = array<i64: 1, 32>}, {transform_indices = @transform_6, window_bounds = array<i64: 16, 32>}, {transform_indices = @transform_7, window_bounds = array<i64: 16, 32>}]} {
    %c0 = arith.constant 0 : index
    %c0_0 = arith.constant 0 : index
    %0 = vector.load %arg3[%c0, %c0_0] : memref<768x32xf32, #tpu.memory_space<vmem>>, vector<768x32xf32>
    %c0_1 = arith.constant 0 : index
    %c0_2 = arith.constant 0 : index
    %1 = vector.load %arg5[%c0_1, %c0_2] : memref<768x32xf32, #tpu.memory_space<vmem>>, vector<768x32xf32>
    %c0_3 = arith.constant 0 : index
    %c0_4 = arith.constant 0 : index
    %2 = vector.load %arg1[%c0_3, %c0_4] : memref<16x768xf32, #tpu.memory_space<vmem>>, vector<16x768xf32>
    %cst = arith.constant dense<0.000000e+00> : vector<16x32xf32>
    %3 = tpu.matmul %2, %0, %cst {dimension_numbers = #tpu.dot_dimension_numbers<[1], [0], [0], [1], [0, 0, 1, 1], [], []>} : vector<16x768xf32>, vector<768x32xf32>, vector<16x32xf32> -> vector<16x32xf32>
    %c0_5 = arith.constant 0 : index
    %c0_6 = arith.constant 0 : index
    %4 = vector.load %arg4[%c0_5, %c0_6] : memref<1x32xf32, #tpu.memory_space<vmem>>, vector<1x32xf32>
    %5 = vector.broadcast %4 : vector<1x32xf32> to vector<16x32xf32>
    %6 = arith.addf %3, %5 : vector<16x32xf32>
    %c0_7 = arith.constant 0 : index
    %c0_8 = arith.constant 0 : index
    %7 = vector.load %arg7[%c0_7, %c0_8] : memref<16x32xf32, #tpu.memory_space<vmem>>, vector<16x32xf32>
    tpu.vector_store %arg7[%c0_7, %c0_8], %6 {strides = array<i32>} : memref<16x32xf32, #tpu.memory_space<vmem>>, vector<16x32xf32>,
    %c0_9 = arith.constant 0 : index
    %c0_10 = arith.constant 0 : index
    %8 = vector.load %arg2[%c0_9, %c0_10] : memref<16x768xf32, #tpu.memory_space<vmem>>, vector<16x768xf32>
    %cst_11 = arith.constant dense<0.000000e+00> : vector<16x32xf32>
    %9 = tpu.matmul %8, %1, %cst_11 {dimension_numbers = #tpu.dot_dimension_numbers<[1], [0], [0], [1], [0, 0, 1, 1], [], []>} : vector<16x768xf32>, vector<768x32xf32>, vector<16x32xf32> -> vector<16x32xf32>
    %c0_12 = arith.constant 0 : index
    %c0_13 = arith.constant 0 : index
    %10 = vector.load %arg6[%c0_12, %c0_13] : memref<1x32xf32, #tpu.memory_space<vmem>>, vector<1x32xf32>
    %11 = vector.broadcast %10 : vector<1x32xf32> to vector<16x32xf32>
    %12 = arith.addf %9, %11 : vector<16x32xf32>
    %c0_14 = arith.constant 0 : index
    %c0_15 = arith.constant 0 : index
    %13 = vector.load %arg8[%c0_14, %c0_15] : memref<16x32xf32, #tpu.memory_space<vmem>>, vector<16x32xf32>
    tpu.vector_store %arg8[%c0_14, %c0_15], %12 {strides = array<i32>} : memref<16x32xf32, #tpu.memory_space<vmem>>, vector<16x32xf32>,
    return
  }
  func.func @transform_0(%arg0: i32) -> (i32, i32) {
    %c0_i32 = arith.constant 0 : i32
    %c0_i32_0 = arith.constant 0 : i32
    return %arg0, %c0_i32 : i32, i32
  }
  func.func @transform_1(%arg0: i32) -> (i32, i32) {
    %c0_i32 = arith.constant 0 : i32
    %c0_i32_0 = arith.constant 0 : i32
    return %arg0, %c0_i32 : i32, i32
  }
  func.func @transform_2(%arg0: i32) -> (i32, i32) {
    %c0_i32 = arith.constant 0 : i32
    %c0_i32_0 = arith.constant 0 : i32
    %c0_i32_1 = arith.constant 0 : i32
    return %c0_i32, %c0_i32_0 : i32, i32
  }
  func.func @transform_3(%arg0: i32) -> (i32, i32) {
    %c0_i32 = arith.constant 0 : i32
    %c0_i32_0 = arith.constant 0 : i32
    %c0_i32_1 = arith.constant 0 : i32
    return %c0_i32, %c0_i32_0 : i32, i32
  }
  func.func @transform_4(%arg0: i32) -> (i32, i32) {
    %c0_i32 = arith.constant 0 : i32
    %c0_i32_0 = arith.constant 0 : i32
    %c0_i32_1 = arith.constant 0 : i32
    return %c0_i32, %c0_i32_0 : i32, i32
  }
  func.func @transform_5(%arg0: i32) -> (i32, i32) {
    %c0_i32 = arith.constant 0 : i32
    %c0_i32_0 = arith.constant 0 : i32
    %c0_i32_1 = arith.constant 0 : i32
    return %c0_i32, %c0_i32_0 : i32, i32
  }
  func.func @transform_6(%arg0: i32) -> (i32, i32) {
    %c0_i32 = arith.constant 0 : i32
    %c0_i32_0 = arith.constant 0 : i32
    return %arg0, %c0_i32 : i32, i32
  }
  func.func @transform_7(%arg0: i32) -> (i32, i32) {
    %c0_i32 = arith.constant 0 : i32
    %c0_i32_0 = arith.constant 0 : i32
    return %arg0, %c0_i32 : i32, i32
  }
}

</mosaic_0001>

<llo_original>
// kernel: tpu_custom_call.1
$region0: #{tpu_custom_call.1}
  #allocation0 [shape = 'u32[]', space=smem, size = 0x4, offset = 0x4, fixed_abs, tag = 'smem constant byte address 0x4 - core index']
  #allocation1 [shape = 'u32[144,128]{1,0:T(1,128)}', space=vmem, size = 0x12000, scoped, tag = 'internal scratch']
  %s0 = inlined_call_operand.vmem [shape: f32[16,768], index: 0, kind: input, shape index: {}]
  %s1 = inlined_call_operand.vmem [shape: f32[16,768], index: 1, kind: input, shape index: {}]
  %s2 = inlined_call_operand.vmem [shape: f32[768,32], index: 2, kind: input, shape index: {}]
  %s3 = inlined_call_operand.vmem [shape: f32[1,32], index: 3, kind: input, shape index: {}]
  %s4 = inlined_call_operand.vmem [shape: f32[768,32], index: 4, kind: input, shape index: {}]
  %s5 = inlined_call_operand.vmem [shape: f32[1,32], index: 5, kind: input, shape index: {}]
  %s6 = inlined_call_operand.hbm [shape: f32[16,32], index: 6, kind: output, shape index: {0}]
  %s7 = inlined_call_operand.hbm [shape: f32[16,32], index: 7, kind: output, shape index: {1}]
  %8 = xla_tuple %s6, %s7
  %s9 = sld [smem:[#allocation0]]
  $region42: #{tpu_custom_call.1} parent=0
    _
  %s11 = ssub.s32 1, %s9
  %s12 = scalar_select 0, %s11, %s9
  $region1: #{tpu_custom_call.1} parent=0
    #allocation2 [shape = 'u8[8192]{0}', space=vmem, size = 0x2000, scoped, tag = 'output window, operand 0, single buffered']
    #allocation3 [shape = 's32[1]{0}', space=sflag, size = 0x4, scoped, tag = 'scoped memory for tpu_custom_call.1']
    #allocation4 [shape = 'u8[8192]{0}', space=vmem, size = 0x2000, scoped, tag = 'output window, operand 1, single buffered']
    #allocation5 [shape = 's32[1]{0}', space=sflag, size = 0x4, scoped, tag = 'scoped memory for tpu_custom_call.1']
    %13 = vsyncpa [#allocation3], 0
    %14 = vsyncpa [#allocation5], 0
    // Predicated region
    $region2: #{tpu_custom_call.1} parent=1 // pred_check
      _
    $region3: #{tpu_custom_call.1} parent=1 // pred_check_branch
      %16 = sbr.rel (0) target = $region5
    $region4: #{tpu_custom_call.1} parent=1 // pred_region
      _
    $region5: #{tpu_custom_call.1} parent=1 // pred_fallthru
      _
    // Predicated region
    $region6: #{tpu_custom_call.1} parent=1 // pred_check
      _
    $region7: #{tpu_custom_call.1} parent=1 // pred_check_branch
      %18 = sbr.rel (0) target = $region9
    $region8: #{tpu_custom_call.1} parent=1 // pred_region
      _
    $region9: #{tpu_custom_call.1} parent=1 // pred_fallthru
      _
    // Predicated region
    $region10: #{tpu_custom_call.1} parent=1 // pred_check
      _
    $region11: #{tpu_custom_call.1} parent=1 // pred_check_branch
      %20 = sbr.rel (0) target = $region13
    $region12: #{tpu_custom_call.1} parent=1 // pred_region
      _
    $region13: #{tpu_custom_call.1} parent=1 // pred_fallthru
      _
    // Predicated region
    $region14: #{tpu_custom_call.1} parent=1 // pred_check
      _
    $region15: #{tpu_custom_call.1} parent=1 // pred_check_branch
      %22 = sbr.rel (0) target = $region17
    $region16: #{tpu_custom_call.1} parent=1 // pred_region
      _
    $region17: #{tpu_custom_call.1} parent=1 // pred_fallthru
      _
    // Predicated region
    $region18: #{tpu_custom_call.1} parent=1 // pred_check
      _
    $region19: #{tpu_custom_call.1} parent=1 // pred_check_branch
      %24 = sbr.rel (0) target = $region21
    $region20: #{tpu_custom_call.1} parent=1 // pred_region
      _
    $region21: #{tpu_custom_call.1} parent=1 // pred_fallthru
      _
    // Predicated region
    $region22: #{tpu_custom_call.1} parent=1 // pred_check
      _
    $region23: #{tpu_custom_call.1} parent=1 // pred_check_branch
      %26 = sbr.rel (0) target = $region25
    $region24: #{tpu_custom_call.1} parent=1 // pred_region
      _
    $region25: #{tpu_custom_call.1} parent=1 // pred_fallthru
      _
    %v27 = vld [vmem:[%s2] sm:$0xff]
    %v28 = vld [vmem:[%s2 + $0x8] sm:$0xff]
    %v29 = vld [vmem:[%s2 + $0x10] sm:$0xff]
    %v30 = vld [vmem:[%s2 + $0x18] sm:$0xff]
    %v31 = vld [vmem:[%s2 + $0x20] sm:$0xff]
    %v32 = vld [vmem:[%s2 + $0x28] sm:$0xff]
    %v33 = vld [vmem:[%s2 + $0x30] sm:$0xff]
    %v34 = vld [vmem:[%s2 + $0x38] sm:$0xff]
    %v35 = vld [vmem:[%s2 + $0x40] sm:$0xff]
    %v36 = vld [vmem:[%s2 + $0x48] sm:$0xff]
    %v37 = vld [vmem:[%s2 + $0x50] sm:$0xff]
    %v38 = vld [vmem:[%s2 + $0x58] sm:$0xff]
    %v39 = vld [vmem:[%s2 + $0x60] sm:$0xff]
    %v40 = vld [vmem:[%s2 + $0x68] sm:$0xff]
    %v41 = vld [vmem:[%s2 + $0x70] sm:$0xff]
    %v42 = vld [vmem:[%s2 + $0x78] sm:$0xff]
    %v43 = vld [vmem:[%s2 + $0x80] sm:$0xff]
    %v44 = vld [vmem:[%s2 + $0x88] sm:$0xff]
    %v45 = vld [vmem:[%s2 + $0x90] sm:$0xff]
    %v46 = vld [vmem:[%s2 + $0x98] sm:$0xff]
    %v47 = vld [vmem:[%s2 + $0xa0] sm:$0xff]
    %v48 = vld [vmem:[%s2 + $0xa8] sm:$0xff]
    %v49 = vld [vmem:[%s2 + $0xb0] sm:$0xff]
    %v50 = vld [vmem:[%s2 + $0xb8] sm:$0xff]
    %v51 = vld [vmem:[%s2 + $0xc0] sm:$0xff]
    %v52 = vld [vmem:[%s2 + $0xc8] sm:$0xff]
    %v53 = vld [vmem:[%s2 + $0xd0] sm:$0xff]
    %v54 = vld [vmem:[%s2 + $0xd8] sm:$0xff]
    %v55 = vld [vmem:[%s2 + $0xe0] sm:$0xff]
    %v56 = vld [vmem:[%s2 + $0xe8] sm:$0xff]
    %v57 = vld [vmem:[%s2 + $0xf0] sm:$0xff]
    %v58 = vld [vmem:[%s2 + $0xf8] sm:$0xff]
    %v59 = vld [vmem:[%s2 + $0x100] sm:$0xff]
    %v60 = vld [vmem:[%s2 + $0x108] sm:$0xff]
    %v61 = vld [vmem:[%s2 + $0x110] sm:$0xff]
    %v62 = vld [vmem:[%s2 + $0x118] sm:$0xff]
    %v63 = vld [vmem:[%s2 + $0x120] sm:$0xff]
    %v64 = vld [vmem:[%s2 + $0x128] sm:$0xff]
    %v65 = vld [vmem:[%s2 + $0x130] sm:$0xff]
    %v66 = vld [vmem:[%s2 + $0x138] sm:$0xff]
    %v67 = vld [vmem:[%s2 + $0x140] sm:$0xff]
    %v68 = vld [vmem:[%s2 + $0x148] sm:$0xff]
    %v69 = vld [vmem:[%s2 + $0x150] sm:$0xff]
    %v70 = vld [vmem:[%s2 + $0x158] sm:$0xff]
    %v71 = vld [vmem:[%s2 + $0x160] sm:$0xff]
    %v72 = vld [vmem:[%s2 + $0x168] sm:$0xff]
    %v73 = vld [vmem:[%s2 + $0x170] sm:$0xff]
    %v74 = vld [vmem:[%s2 + $0x178] sm:$0xff]
    %v75 = vld [vmem:[%s2 + $0x180] sm:$0xff]
    %v76 = vld [vmem:[%s2 + $0x188] sm:$0xff]
    %v77 = vld [vmem:[%s2 + $0x190] sm:$0xff]
    %v78 = vld [vmem:[%s2 + $0x198] sm:$0xff]
    %v79 = vld [vmem:[%s2 + $0x1a0] sm:$0xff]
    %v80 = vld [vmem:[%s2 + $0x1a8] sm:$0xff]
    %v81 = vld [vmem:[%s2 + $0x1b0] sm:$0xff]
    %v82 = vld [vmem:[%s2 + $0x1b8] sm:$0xff]
    %v83 = vld [vmem:[%s2 + $0x1c0] sm:$0xff]
    %v84 = vld [vmem:[%s2 + $0x1c8] sm:$0xff]
    %v85 = vld [vmem:[%s2 + $0x1d0] sm:$0xff]
    %v86 = vld [vmem:[%s2 + $0x1d8] sm:$0xff]
    %v87 = vld [vmem:[%s2 + $0x1e0] sm:$0xff]
    %v88 = vld [vmem:[%s2 + $0x1e8] sm:$0xff]
    %v89 = vld [vmem:[%s2 + $0x1f0] sm:$0xff]
    %v90 = vld [vmem:[%s2 + $0x1f8] sm:$0xff]
    %v91 = vld [vmem:[%s2 + $0x200] sm:$0xff]
    %v92 = vld [vmem:[%s2 + $0x208] sm:$0xff]
    %v93 = vld [vmem:[%s2 + $0x210] sm:$0xff]
    %v94 = vld [vmem:[%s2 + $0x218] sm:$0xff]
    %v95 = vld [vmem:[%s2 + $0x220] sm:$0xff]
    %v96 = vld [vmem:[%s2 + $0x228] sm:$0xff]
    %v97 = vld [vmem:[%s2 + $0x230] sm:$0xff]
    %v98 = vld [vmem:[%s2 + $0x238] sm:$0xff]
    %v99 = vld [vmem:[%s2 + $0x240] sm:$0xff]
    %v100 = vld [vmem:[%s2 + $0x248] sm:$0xff]
    %v101 = vld [vmem:[%s2 + $0x250] sm:$0xff]
    %v102 = vld [vmem:[%s2 + $0x258] sm:$0xff]
    %v103 = vld [vmem:[%s2 + $0x260] sm:$0xff]
    %v104 = vld [vmem:[%s2 + $0x268] sm:$0xff]
    %v105 = vld [vmem:[%s2 + $0x270] sm:$0xff]
    %v106 = vld [vmem:[%s2 + $0x278] sm:$0xff]
    %v107 = vld [vmem:[%s2 + $0x280] sm:$0xff]
    %v108 = vld [vmem:[%s2 + $0x288] sm:$0xff]
    %v109 = vld [vmem:[%s2 + $0x290] sm:$0xff]
    %v110 = vld [vmem:[%s2 + $0x298] sm:$0xff]
    %v111 = vld [vmem:[%s2 + $0x2a0] sm:$0xff]
    %v112 = vld [vmem:[%s2 + $0x2a8] sm:$0xff]
    %v113 = vld [vmem:[%s2 + $0x2b0] sm:$0xff]
    %v114 = vld [vmem:[%s2 + $0x2b8] sm:$0xff]
    %v115 = vld [vmem:[%s2 + $0x2c0] sm:$0xff]
    %v116 = vld [vmem:[%s2 + $0x2c8] sm:$0xff]
    %v117 = vld [vmem:[%s2 + $0x2d0] sm:$0xff]
    %v118 = vld [vmem:[%s2 + $0x2d8] sm:$0xff]
    %v119 = vld [vmem:[%s2 + $0x2e0] sm:$0xff]
    %v120 = vld [vmem:[%s2 + $0x2e8] sm:$0xff]
    %v121 = vld [vmem:[%s2 + $0x2f0] sm:$0xff]
    %v122 = vld [vmem:[%s2 + $0x2f8] sm:$0xff]
    %v123 = vld [vmem:[%s4] sm:$0xff]
    %v124 = vld [vmem:[%s4 + $0x8] sm:$0xff]
    %v125 = vld [vmem:[%s4 + $0x10] sm:$0xff]
    %v126 = vld [vmem:[%s4 + $0x18] sm:$0xff]
    %v127 = vld [vmem:[%s4 + $0x20] sm:$0xff]
    %v128 = vld [vmem:[%s4 + $0x28] sm:$0xff]
    %v129 = vld [vmem:[%s4 + $0x30] sm:$0xff]
    %v130 = vld [vmem:[%s4 + $0x38] sm:$0xff]
    %v131 = vld [vmem:[%s4 + $0x40] sm:$0xff]
    %v132 = vld [vmem:[%s4 + $0x48] sm:$0xff]
    %v133 = vld [vmem:[%s4 + $0x50] sm:$0xff]
    %v134 = vld [vmem:[%s4 + $0x58] sm:$0xff]
    %v135 = vld [vmem:[%s4 + $0x60] sm:$0xff]
    %v136 = vld [vmem:[%s4 + $0x68] sm:$0xff]
    %v137 = vld [vmem:[%s4 + $0x70] sm:$0xff]
    %v138 = vld [vmem:[%s4 + $0x78] sm:$0xff]
    %v139 = vld [vmem:[%s4 + $0x80] sm:$0xff]
    %v140 = vld [vmem:[%s4 + $0x88] sm:$0xff]
    %v141 = vld [vmem:[%s4 + $0x90] sm:$0xff]
    %v142 = vld [vmem:[%s4 + $0x98] sm:$0xff]
    %v143 = vld [vmem:[%s4 + $0xa0] sm:$0xff]
    %v144 = vld [vmem:[%s4 + $0xa8] sm:$0xff]
    %v145 = vld [vmem:[%s4 + $0xb0] sm:$0xff]
    %v146 = vld [vmem:[%s4 + $0xb8] sm:$0xff]
    %v147 = vld [vmem:[%s4 + $0xc0] sm:$0xff]
    %v148 = vld [vmem:[%s4 + $0xc8] sm:$0xff]
    %v149 = vld [vmem:[%s4 + $0xd0] sm:$0xff]
    %v150 = vld [vmem:[%s4 + $0xd8] sm:$0xff]
    %v151 = vld [vmem:[%s4 + $0xe0] sm:$0xff]
    %v152 = vld [vmem:[%s4 + $0xe8] sm:$0xff]
    %v153 = vld [vmem:[%s4 + $0xf0] sm:$0xff]
    %v154 = vld [vmem:[%s4 + $0xf8] sm:$0xff]
    %v155 = vld [vmem:[%s4 + $0x100] sm:$0xff]
    %v156 = vld [vmem:[%s4 + $0x108] sm:$0xff]
    %v157 = vld [vmem:[%s4 + $0x110] sm:$0xff]
    %v158 = vld [vmem:[%s4 + $0x118] sm:$0xff]
    %v159 = vld [vmem:[%s4 + $0x120] sm:$0xff]
    %v160 = vld [vmem:[%s4 + $0x128] sm:$0xff]
    %v161 = vld [vmem:[%s4 + $0x130] sm:$0xff]
    %v162 = vld [vmem:[%s4 + $0x138] sm:$0xff]
    %v163 = vld [vmem:[%s4 + $0x140] sm:$0xff]
    %v164 = vld [vmem:[%s4 + $0x148] sm:$0xff]
    %v165 = vld [vmem:[%s4 + $0x150] sm:$0xff]
    %v166 = vld [vmem:[%s4 + $0x158] sm:$0xff]
    %v167 = vld [vmem:[%s4 + $0x160] sm:$0xff]
    %v168 = vld [vmem:[%s4 + $0x168] sm:$0xff]
    %v169 = vld [vmem:[%s4 + $0x170] sm:$0xff]
    %v170 = vld [vmem:[%s4 + $0x178] sm:$0xff]
    %v171 = vld [vmem:[%s4 + $0x180] sm:$0xff]
    %v172 = vld [vmem:[%s4 + $0x188] sm:$0xff]
    %v173 = vld [vmem:[%s4 + $0x190] sm:$0xff]
    %v174 = vld [vmem:[%s4 + $0x198] sm:$0xff]
    %v175 = vld [vmem:[%s4 + $0x1a0] sm:$0xff]
    %v176 = vld [vmem:[%s4 + $0x1a8] sm:$0xff]
    %v177 = vld [vmem:[%s4 + $0x1b0] sm:$0xff]
    %v178 = vld [vmem:[%s4 + $0x1b8] sm:$0xff]
    %v179 = vld [vmem:[%s4 + $0x1c0] sm:$0xff]
    %v180 = vld [vmem:[%s4 + $0x1c8] sm:$0xff]
    %v181 = vld [vmem:[%s4 + $0x1d0] sm:$0xff]
    %v182 = vld [vmem:[%s4 + $0x1d8] sm:$0xff]
    %v183 = vld [vmem:[%s4 + $0x1e0] sm:$0xff]
    %v184 = vld [vmem:[%s4 + $0x1e8] sm:$0xff]
    %v185 = vld [vmem:[%s4 + $0x1f0] sm:$0xff]
    %v186 = vld [vmem:[%s4 + $0x1f8] sm:$0xff]
    %v187 = vld [vmem:[%s4 + $0x200] sm:$0xff]
    %v188 = vld [vmem:[%s4 + $0x208] sm:$0xff]
    %v189 = vld [vmem:[%s4 + $0x210] sm:$0xff]
    %v190 = vld [vmem:[%s4 + $0x218] sm:$0xff]
    %v191 = vld [vmem:[%s4 + $0x220] sm:$0xff]
    %v192 = vld [vmem:[%s4 + $0x228] sm:$0xff]
    %v193 = vld [vmem:[%s4 + $0x230] sm:$0xff]
    %v194 = vld [vmem:[%s4 + $0x238] sm:$0xff]
    %v195 = vld [vmem:[%s4 + $0x240] sm:$0xff]
    %v196 = vld [vmem:[%s4 + $0x248] sm:$0xff]
    %v197 = vld [vmem:[%s4 + $0x250] sm:$0xff]
    %v198 = vld [vmem:[%s4 + $0x258] sm:$0xff]
    %v199 = vld [vmem:[%s4 + $0x260] sm:$0xff]
    %v200 = vld [vmem:[%s4 + $0x268] sm:$0xff]
    %v201 = vld [vmem:[%s4 + $0x270] sm:$0xff]
    %v202 = vld [vmem:[%s4 + $0x278] sm:$0xff]
    %v203 = vld [vmem:[%s4 + $0x280] sm:$0xff]
    %v204 = vld [vmem:[%s4 + $0x288] sm:$0xff]
    %v205 = vld [vmem:[%s4 + $0x290] sm:$0xff]
    %v206 = vld [vmem:[%s4 + $0x298] sm:$0xff]
    %v207 = vld [vmem:[%s4 + $0x2a0] sm:$0xff]
    %v208 = vld [vmem:[%s4 + $0x2a8] sm:$0xff]
    %v209 = vld [vmem:[%s4 + $0x2b0] sm:$0xff]
    %v210 = vld [vmem:[%s4 + $0x2b8] sm:$0xff]
    %v211 = vld [vmem:[%s4 + $0x2c0] sm:$0xff]
    %v212 = vld [vmem:[%s4 + $0x2c8] sm:$0xff]
    %v213 = vld [vmem:[%s4 + $0x2d0] sm:$0xff]
    %v214 = vld [vmem:[%s4 + $0x2d8] sm:$0xff]
    %v215 = vld [vmem:[%s4 + $0x2e0] sm:$0xff]
    %v216 = vld [vmem:[%s4 + $0x2e8] sm:$0xff]
    %v217 = vld [vmem:[%s4 + $0x2f0] sm:$0xff]
    %v218 = vld [vmem:[%s4 + $0x2f8] sm:$0xff]
    %v219 = vld [vmem:[%s0] sm:$0xff]
    %v220 = vld [vmem:[%s0 + $0x8] sm:$0xff]
    %v221 = vld [vmem:[%s0 + $0x10] sm:$0xff]
    %v222 = vld [vmem:[%s0 + $0x18] sm:$0xff]
    %v223 = vld [vmem:[%s0 + $0x20] sm:$0xff]
    %v224 = vld [vmem:[%s0 + $0x28] sm:$0xff]
    %v225 = vld [vmem:[%s0 + $0x30] sm:$0xff]
    %v226 = vld [vmem:[%s0 + $0x38] sm:$0xff]
    %v227 = vld [vmem:[%s0 + $0x40] sm:$0xff]
    %v228 = vld [vmem:[%s0 + $0x48] sm:$0xff]
    %v229 = vld [vmem:[%s0 + $0x50] sm:$0xff]
    %v230 = vld [vmem:[%s0 + $0x58] sm:$0xff]
    %v231 = vld [vmem:[%s3] sm:$0x1]
    %v233 = vlaneseq
    %v234 = vshrl.u32 %v233, 7
    %v235 = vsub.s32 0, %v234
    %v236 = vrot.slane %v231, %v235
    %238 = vmatprep.subr.mxu0 0.0
    %239 = vmatpush1.msra.mxu0 %v27
    %240 = vmatprep.subr.mxu0 0.0
    %241 = vmatpush1.msra.mxu0 %v28
    %242 = vmatprep.subr.mxu0 0.0
    %243 = vmatpush1.msra.mxu0 %v29
    %244 = vmatprep.subr.mxu0 0.0
    %245 = vmatpush1.msra.mxu0 %v30
    %246 = vmatprep.subr.mxu0 0.0
    %247 = vmatpush1.msra.mxu0 %v31
    %248 = vmatprep.subr.mxu0 0.0
    %249 = vmatpush1.msra.mxu0 %v32
    %250 = vmatprep.subr.mxu0 0.0
    %251 = vmatpush1.msra.mxu0 %v33
    %252 = vmatprep.subr.mxu0 0.0
    %253 = vmatpush1.msra.mxu0 %v34
    %254 = vmatprep.subr.mxu0 0.0
    %255 = vmatpush1.msra.mxu0 %v35
    %256 = vmatprep.subr.mxu0 0.0
    %257 = vmatpush1.msra.mxu0 %v36
    %258 = vmatprep.subr.mxu0 0.0
    %259 = vmatpush1.msra.mxu0 %v37
    %260 = vmatprep.subr.mxu0 0.0
    %261 = vmatpush1.msra.mxu0 %v38
    %262 = vmatprep.subr.mxu0 0.0
    %263 = vmatpush1.msra.mxu0 %v39
    %264 = vmatprep.subr.mxu0 0.0
    %265 = vmatpush1.msra.mxu0 %v40
    %266 = vmatprep.subr.mxu0 0.0
    %267 = vmatpush1.msra.mxu0 %v41
    %268 = vmatprep.subr.mxu0 0.0
    %269 = vmatpush1.msra.mxu0 %v42
    %270 = vmatprep.subr.mxu0 0.0
    %271 = vmatpush1.msra.mxu0 %v43
    %272 = vmatprep.subr.mxu0 0.0
    %273 = vmatpush1.msra.mxu0 %v44
    %274 = vmatprep.subr.mxu0 0.0
    %275 = vmatpush1.msra.mxu0 %v45
    %276 = vmatprep.subr.mxu0 0.0
    %277 = vmatpush1.msra.mxu0 %v46
    %278 = vmatprep.subr.mxu0 0.0
    %279 = vmatpush1.msra.mxu0 %v47
    %280 = vmatprep.subr.mxu0 0.0
    %281 = vmatpush1.msra.mxu0 %v48
    %282 = vmatprep.subr.mxu0 0.0
    %283 = vmatpush1.msra.mxu0 %v49
    %284 = vmatprep.subr.mxu0 0.0
    %285 = vmatpush1.msra.mxu0 %v50
    %286 = vmatprep.subr.mxu0 0.0
    %287 = vmatpush1.msra.mxu0 %v51
    %288 = vmatprep.subr.mxu0 0.0
    %289 = vmatpush1.msra.mxu0 %v52
    %290 = vmatprep.subr.mxu0 0.0
    %291 = vmatpush1.msra.mxu0 %v53
    %292 = vmatprep.subr.mxu0 0.0
    %293 = vmatpush1.msra.mxu0 %v54
    %294 = vmatprep.subr.mxu0 0.0
    %295 = vmatpush1.msra.mxu0 %v55
    %296 = vmatprep.subr.mxu0 0.0
    %297 = vmatpush1.msra.mxu0 %v56
    %298 = vmatprep.subr.mxu0 0.0
    %299 = vmatpush1.msra.mxu0 %v57
    %300 = vmatprep.subr.mxu0 0.0
    %301 = vmatpush1.msra.mxu0 %v58
    %302 = vmatprep.mubr.f32.mxu0 %v220
    %303 = vmatmul.mubr.f32.gmra.mrb[0].mxu0 %v219
    %v304 = vpop.f32.mrb[0].mxu0
    %v305 = vadd.f32 %v236, %v304
    %v306 = vpop.f32.mrb[0].mxu0
    %307 = vmatprep.mubr.f32.mxu0 %v226
    %308 = vmatmul.mubr.f32.gmra.mrb[0].mxu0 %v225
    %v309 = vpop.f32.mrb[0].mxu0
    %v310 = vadd.f32 %v236, %v309
    %v311 = vpop.f32.mrb[0].mxu0
    %312 = vdwg.mxu0
    %313 = vmatprep.subr.mxu0 0.0
    %314 = vmatpush1.msra.mxu0 %v59
    %315 = vmatprep.subr.mxu0 0.0
    %316 = vmatpush1.msra.mxu0 %v60
    %317 = vmatprep.subr.mxu0 0.0
    %318 = vmatpush1.msra.mxu0 %v61
    %319 = vmatprep.subr.mxu0 0.0
    %320 = vmatpush1.msra.mxu0 %v62
    %321 = vmatprep.subr.mxu0 0.0
    %322 = vmatpush1.msra.mxu0 %v63
    %323 = vmatprep.subr.mxu0 0.0
    %324 = vmatpush1.msra.mxu0 %v64
    %325 = vmatprep.subr.mxu0 0.0
    %326 = vmatpush1.msra.mxu0 %v65
    %327 = vmatprep.subr.mxu0 0.0
    %328 = vmatpush1.msra.mxu0 %v66
    %329 = vmatprep.subr.mxu0 0.0
    %330 = vmatpush1.msra.mxu0 %v67
    %331 = vmatprep.subr.mxu0 0.0
    %332 = vmatpush1.msra.mxu0 %v68
    %333 = vmatprep.subr.mxu0 0.0
    %334 = vmatpush1.msra.mxu0 %v69
    %335 = vmatprep.subr.mxu0 0.0
    %336 = vmatpush1.msra.mxu0 %v70
    %337 = vmatprep.subr.mxu0 0.0
    %338 = vmatpush1.msra.mxu0 %v71
    %339 = vmatprep.subr.mxu0 0.0
    %340 = vmatpush1.msra.mxu0 %v72
    %341 = vmatprep.subr.mxu0 0.0
    %342 = vmatpush1.msra.mxu0 %v73
    %343 = vmatprep.subr.mxu0 0.0
    %344 = vmatpush1.msra.mxu0 %v74
    %345 = vmatprep.subr.mxu0 0.0
    %346 = vmatpush1.msra.mxu0 %v75
    %347 = vmatprep.subr.mxu0 0.0
    %348 = vmatpush1.msra.mxu0 %v76
    %349 = vmatprep.subr.mxu0 0.0
    %350 = vmatpush1.msra.mxu0 %v77
    %351 = vmatprep.subr.mxu0 0.0
    %352 = vmatpush1.msra.mxu0 %v78
    %353 = vmatprep.subr.mxu0 0.0
    %354 = vmatpush1.msra.mxu0 %v79
    %355 = vmatprep.subr.mxu0 0.0
    %356 = vmatpush1.msra.mxu0 %v80
    %357 = vmatprep.subr.mxu0 0.0
    %358 = vmatpush1.msra.mxu0 %v81
    %359 = vmatprep.subr.mxu0 0.0
    %360 = vmatpush1.msra.mxu0 %v82
    %361 = vmatprep.subr.mxu0 0.0
    %362 = vmatpush1.msra.mxu0 %v83
    %363 = vmatprep.subr.mxu0 0.0
    %364 = vmatpush1.msra.mxu0 %v84
    %365 = vmatprep.subr.mxu0 0.0
    %366 = vmatpush1.msra.mxu0 %v85
    %367 = vmatprep.subr.mxu0 0.0
    %368 = vmatpush1.msra.mxu0 %v86
    %369 = vmatprep.subr.mxu0 0.0
    %370 = vmatpush1.msra.mxu0 %v87
    %371 = vmatprep.subr.mxu0 0.0
    %372 = vmatpush1.msra.mxu0 %v88
    %373 = vmatprep.subr.mxu0 0.0
    %374 = vmatpush1.msra.mxu0 %v89
    %375 = vmatprep.subr.mxu0 0.0
    %376 = vmatpush1.msra.mxu0 %v90
    %377 = vmatprep.mubr.f32.mxu0 %v222
    %378 = vmatmul.mubr.f32.gmra.mrb[0].mxu0 %v221
    %v379 = vpop.f32.mrb[0].mxu0
    %v380 = vadd.f32 %v305, %v379
    %v381 = vpop.f32.mrb[0].mxu0
    %382 = vmatprep.mubr.f32.mxu0 %v228
    %383 = vmatmul.mubr.f32.gmra.mrb[0].mxu0 %v227
    %v384 = vpop.f32.mrb[0].mxu0
    %v385 = vadd.f32 %v310, %v384
    %v386 = vpop.f32.mrb[0].mxu0
    %387 = vdwg.mxu0
    %388 = vmatprep.subr.mxu0 0.0
    %389 = vmatpush1.msra.mxu0 %v91
    %390 = vmatprep.subr.mxu0 0.0
    %391 = vmatpush1.msra.mxu0 %v92
    %392 = vmatprep.subr.mxu0 0.0
    %393 = vmatpush1.msra.mxu0 %v93
    %394 = vmatprep.subr.mxu0 0.0
    %395 = vmatpush1.msra.mxu0 %v94
    %396 = vmatprep.subr.mxu0 0.0
    %397 = vmatpush1.msra.mxu0 %v95
    %398 = vmatprep.subr.mxu0 0.0
    %399 = vmatpush1.msra.mxu0 %v96
    %400 = vmatprep.subr.mxu0 0.0
    %401 = vmatpush1.msra.mxu0 %v97
    %402 = vmatprep.subr.mxu0 0.0
    %403 = vmatpush1.msra.mxu0 %v98
    %404 = vmatprep.subr.mxu0 0.0
    %405 = vmatpush1.msra.mxu0 %v99
    %406 = vmatprep.subr.mxu0 0.0
    %407 = vmatpush1.msra.mxu0 %v100
    %408 = vmatprep.subr.mxu0 0.0
    %409 = vmatpush1.msra.mxu0 %v101
    %410 = vmatprep.subr.mxu0 0.0
    %411 = vmatpush1.msra.mxu0 %v102
    %412 = vmatprep.subr.mxu0 0.0
    %413 = vmatpush1.msra.mxu0 %v103
    %414 = vmatprep.subr.mxu0 0.0
    %415 = vmatpush1.msra.mxu0 %v104
    %416 = vmatprep.subr.mxu0 0.0
    %417 = vmatpush1.msra.mxu0 %v105
    %418 = vmatprep.subr.mxu0 0.0
    %419 = vmatpush1.msra.mxu0 %v106
    %420 = vmatprep.subr.mxu0 0.0
    %421 = vmatpush1.msra.mxu0 %v107
    %422 = vmatprep.subr.mxu0 0.0
    %423 = vmatpush1.msra.mxu0 %v108
    %424 = vmatprep.subr.mxu0 0.0
    %425 = vmatpush1.msra.mxu0 %v109
    %426 = vmatprep.subr.mxu0 0.0
    %427 = vmatpush1.msra.mxu0 %v110
    %428 = vmatprep.subr.mxu0 0.0
    %429 = vmatpush1.msra.mxu0 %v111
    %430 = vmatprep.subr.mxu0 0.0
    %431 = vmatpush1.msra.mxu0 %v112
    %432 = vmatprep.subr.mxu0 0.0
    %433 = vmatpush1.msra.mxu0 %v113
    %434 = vmatprep.subr.mxu0 0.0
    %435 = vmatpush1.msra.mxu0 %v114
    %436 = vmatprep.subr.mxu0 0.0
    %437 = vmatpush1.msra.mxu0 %v115
    %438 = vmatprep.subr.mxu0 0.0
    %439 = vmatpush1.msra.mxu0 %v116
    %440 = vmatprep.subr.mxu0 0.0
    %441 = vmatpush1.msra.mxu0 %v117
    %442 = vmatprep.subr.mxu0 0.0
    %443 = vmatpush1.msra.mxu0 %v118
    %444 = vmatprep.subr.mxu0 0.0
    %445 = vmatpush1.msra.mxu0 %v119
    %446 = vmatprep.subr.mxu0 0.0
    %447 = vmatpush1.msra.mxu0 %v120
    %448 = vmatprep.subr.mxu0 0.0
    %449 = vmatpush1.msra.mxu0 %v121
    %450 = vmatprep.subr.mxu0 0.0
    %451 = vmatpush1.msra.mxu0 %v122
    %452 = vmatprep.mubr.f32.mxu0 %v224
    %453 = vmatmul.mubr.f32.gmra.mrb[0].mxu0 %v223
    %v454 = vpop.f32.mrb[0].mxu0
    %v455 = vadd.f32 %v380, %v454
    %v456 = vpop.f32.mrb[0].mxu0
    %457 = vmatprep.mubr.f32.mxu0 %v230
    %458 = vmatmul.mubr.f32.gmra.mrb[0].mxu0 %v229
    %v459 = vpop.f32.mrb[0].mxu0
    %v460 = vadd.f32 %v385, %v459
    %v461 = vpop.f32.mrb[0].mxu0
    %462 = vdwg.mxu0
    %vm463 = vcmask 261120
    %464 = vst.msk [vmem:[#allocation2] sm:$0xff] %vm463, %v455
    %465 = vst.msk [vmem:[#allocation2 + $0x8] sm:$0xff] %vm463, %v460
    %v466 = vld [vmem:[%s1] sm:$0xff]
    %v467 = vld [vmem:[%s1 + $0x8] sm:$0xff]
    %v468 = vld [vmem:[%s1 + $0x10] sm:$0xff]
    %v469 = vld [vmem:[%s1 + $0x18] sm:$0xff]
    %v470 = vld [vmem:[%s1 + $0x20] sm:$0xff]
    %v471 = vld [vmem:[%s1 + $0x28] sm:$0xff]
    %v472 = vld [vmem:[%s1 + $0x30] sm:$0xff]
    %v473 = vld [vmem:[%s1 + $0x38] sm:$0xff]
    %v474 = vld [vmem:[%s1 + $0x40] sm:$0xff]
    %v475 = vld [vmem:[%s1 + $0x48] sm:$0xff]
    %v476 = vld [vmem:[%s1 + $0x50] sm:$0xff]
    %v477 = vld [vmem:[%s1 + $0x58] sm:$0xff]
    %v478 = vld [vmem:[%s5] sm:$0x1]
    %v480 = vlaneseq
    %v481 = vshrl.u32 %v480, 7
    %v482 = vsub.s32 0, %v481
    %v483 = vrot.slane %v478, %v482
    %485 = vmatprep.subr.mxu0 0.0
    %486 = vmatpush1.msra.mxu0 %v123
    %487 = vmatprep.subr.mxu0 0.0
    %488 = vmatpush1.msra.mxu0 %v124
    %489 = vmatprep.subr.mxu0 0.0
    %490 = vmatpush1.msra.mxu0 %v125
    %491 = vmatprep.subr.mxu0 0.0
    %492 = vmatpush1.msra.mxu0 %v126
    %493 = vmatprep.subr.mxu0 0.0
    %494 = vmatpush1.msra.mxu0 %v127
    %495 = vmatprep.subr.mxu0 0.0
    %496 = vmatpush1.msra.mxu0 %v128
    %497 = vmatprep.subr.mxu0 0.0
    %498 = vmatpush1.msra.mxu0 %v129
    %499 = vmatprep.subr.mxu0 0.0
    %500 = vmatpush1.msra.mxu0 %v130
    %501 = vmatprep.subr.mxu0 0.0
    %502 = vmatpush1.msra.mxu0 %v131
    %503 = vmatprep.subr.mxu0 0.0
    %504 = vmatpush1.msra.mxu0 %v132
    %505 = vmatprep.subr.mxu0 0.0
    %506 = vmatpush1.msra.mxu0 %v133
    %507 = vmatprep.subr.mxu0 0.0
    %508 = vmatpush1.msra.mxu0 %v134
    %509 = vmatprep.subr.mxu0 0.0
    %510 = vmatpush1.msra.mxu0 %v135
    %511 = vmatprep.subr.mxu0 0.0
    %512 = vmatpush1.msra.mxu0 %v136
    %513 = vmatprep.subr.mxu0 0.0
    %514 = vmatpush1.msra.mxu0 %v137
    %515 = vmatprep.subr.mxu0 0.0
    %516 = vmatpush1.msra.mxu0 %v138
    %517 = vmatprep.subr.mxu0 0.0
    %518 = vmatpush1.msra.mxu0 %v139
    %519 = vmatprep.subr.mxu0 0.0
    %520 = vmatpush1.msra.mxu0 %v140
    %521 = vmatprep.subr.mxu0 0.0
    %522 = vmatpush1.msra.mxu0 %v141
    %523 = vmatprep.subr.mxu0 0.0
    %524 = vmatpush1.msra.mxu0 %v142
    %525 = vmatprep.subr.mxu0 0.0
    %526 = vmatpush1.msra.mxu0 %v143
    %527 = vmatprep.subr.mxu0 0.0
    %528 = vmatpush1.msra.mxu0 %v144
    %529 = vmatprep.subr.mxu0 0.0
    %530 = vmatpush1.msra.mxu0 %v145
    %531 = vmatprep.subr.mxu0 0.0
    %532 = vmatpush1.msra.mxu0 %v146
    %533 = vmatprep.subr.mxu0 0.0
    %534 = vmatpush1.msra.mxu0 %v147
    %535 = vmatprep.subr.mxu0 0.0
    %536 = vmatpush1.msra.mxu0 %v148
    %537 = vmatprep.subr.mxu0 0.0
    %538 = vmatpush1.msra.mxu0 %v149
    %539 = vmatprep.subr.mxu0 0.0
    %540 = vmatpush1.msra.mxu0 %v150
    %541 = vmatprep.subr.mxu0 0.0
    %542 = vmatpush1.msra.mxu0 %v151
    %543 = vmatprep.subr.mxu0 0.0
    %544 = vmatpush1.msra.mxu0 %v152
    %545 = vmatprep.subr.mxu0 0.0
    %546 = vmatpush1.msra.mxu0 %v153
    %547 = vmatprep.subr.mxu0 0.0
    %548 = vmatpush1.msra.mxu0 %v154
    %549 = vmatprep.mubr.f32.mxu0 %v467
    %550 = vmatmul.mubr.f32.gmra.mrb[0].mxu0 %v466
    %v551 = vpop.f32.mrb[0].mxu0
    %v552 = vadd.f32 %v483, %v551
    %v553 = vpop.f32.mrb[0].mxu0
    %554 = vmatprep.mubr.f32.mxu0 %v473
    %555 = vmatmul.mubr.f32.gmra.mrb[0].mxu0 %v472
    %v556 = vpop.f32.mrb[0].mxu0
    %v557 = vadd.f32 %v483, %v556
    %v558 = vpop.f32.mrb[0].mxu0
    %559 = vdwg.mxu0
    %560 = vmatprep.subr.mxu0 0.0
    %561 = vmatpush1.msra.mxu0 %v155
    %562 = vmatprep.subr.mxu0 0.0
    %563 = vmatpush1.msra.mxu0 %v156
    %564 = vmatprep.subr.mxu0 0.0
    %565 = vmatpush1.msra.mxu0 %v157
    %566 = vmatprep.subr.mxu0 0.0
    %567 = vmatpush1.msra.mxu0 %v158
    %568 = vmatprep.subr.mxu0 0.0
    %569 = vmatpush1.msra.mxu0 %v159
    %570 = vmatprep.subr.mxu0 0.0
    %571 = vmatpush1.msra.mxu0 %v160
    %572 = vmatprep.subr.mxu0 0.0
    %573 = vmatpush1.msra.mxu0 %v161
    %574 = vmatprep.subr.mxu0 0.0
    %575 = vmatpush1.msra.mxu0 %v162
    %576 = vmatprep.subr.mxu0 0.0
    %577 = vmatpush1.msra.mxu0 %v163
    %578 = vmatprep.subr.mxu0 0.0
    %579 = vmatpush1.msra.mxu0 %v164
    %580 = vmatprep.subr.mxu0 0.0
    %581 = vmatpush1.msra.mxu0 %v165
    %582 = vmatprep.subr.mxu0 0.0
    %583 = vmatpush1.msra.mxu0 %v166
    %584 = vmatprep.subr.mxu0 0.0
    %585 = vmatpush1.msra.mxu0 %v167
    %586 = vmatprep.subr.mxu0 0.0
    %587 = vmatpush1.msra.mxu0 %v168
    %588 = vmatprep.subr.mxu0 0.0
    %589 = vmatpush1.msra.mxu0 %v169
    %590 = vmatprep.subr.mxu0 0.0
    %591 = vmatpush1.msra.mxu0 %v170
    %592 = vmatprep.subr.mxu0 0.0
    %593 = vmatpush1.msra.mxu0 %v171
    %594 = vmatprep.subr.mxu0 0.0
    %595 = vmatpush1.msra.mxu0 %v172
    %596 = vmatprep.subr.mxu0 0.0
    %597 = vmatpush1.msra.mxu0 %v173
    %598 = vmatprep.subr.mxu0 0.0
    %599 = vmatpush1.msra.mxu0 %v174
    %600 = vmatprep.subr.mxu0 0.0
    %601 = vmatpush1.msra.mxu0 %v175
    %602 = vmatprep.subr.mxu0 0.0
    %603 = vmatpush1.msra.mxu0 %v176
    %604 = vmatprep.subr.mxu0 0.0
    %605 = vmatpush1.msra.mxu0 %v177
    %606 = vmatprep.subr.mxu0 0.0
    %607 = vmatpush1.msra.mxu0 %v178
    %608 = vmatprep.subr.mxu0 0.0
    %609 = vmatpush1.msra.mxu0 %v179
    %610 = vmatprep.subr.mxu0 0.0
    %611 = vmatpush1.msra.mxu0 %v180
    %612 = vmatprep.subr.mxu0 0.0
    %613 = vmatpush1.msra.mxu0 %v181
    %614 = vmatprep.subr.mxu0 0.0
    %615 = vmatpush1.msra.mxu0 %v182
    %616 = vmatprep.subr.mxu0 0.0
    %617 = vmatpush1.msra.mxu0 %v183
    %618 = vmatprep.subr.mxu0 0.0
    %619 = vmatpush1.msra.mxu0 %v184
    %620 = vmatprep.subr.mxu0 0.0
    %621 = vmatpush1.msra.mxu0 %v185
    %622 = vmatprep.subr.mxu0 0.0
    %623 = vmatpush1.msra.mxu0 %v186
    %624 = vmatprep.mubr.f32.mxu0 %v469
    %625 = vmatmul.mubr.f32.gmra.mrb[0].mxu0 %v468
    %v626 = vpop.f32.mrb[0].mxu0
    %v627 = vadd.f32 %v552, %v626
    %v628 = vpop.f32.mrb[0].mxu0
    %629 = vmatprep.mubr.f32.mxu0 %v475
    %630 = vmatmul.mubr.f32.gmra.mrb[0].mxu0 %v474
    %v631 = vpop.f32.mrb[0].mxu0
    %v632 = vadd.f32 %v557, %v631
    %v633 = vpop.f32.mrb[0].mxu0
    %634 = vdwg.mxu0
    %635 = vmatprep.subr.mxu0 0.0
    %636 = vmatpush1.msra.mxu0 %v187
    %637 = vmatprep.subr.mxu0 0.0
    %638 = vmatpush1.msra.mxu0 %v188
    %639 = vmatprep.subr.mxu0 0.0
    %640 = vmatpush1.msra.mxu0 %v189
    %641 = vmatprep.subr.mxu0 0.0
    %642 = vmatpush1.msra.mxu0 %v190
    %643 = vmatprep.subr.mxu0 0.0
    %644 = vmatpush1.msra.mxu0 %v191
    %645 = vmatprep.subr.mxu0 0.0
    %646 = vmatpush1.msra.mxu0 %v192
    %647 = vmatprep.subr.mxu0 0.0
    %648 = vmatpush1.msra.mxu0 %v193
    %649 = vmatprep.subr.mxu0 0.0
    %650 = vmatpush1.msra.mxu0 %v194
    %651 = vmatprep.subr.mxu0 0.0
    %652 = vmatpush1.msra.mxu0 %v195
    %653 = vmatprep.subr.mxu0 0.0
    %654 = vmatpush1.msra.mxu0 %v196
    %655 = vmatprep.subr.mxu0 0.0
    %656 = vmatpush1.msra.mxu0 %v197
    %657 = vmatprep.subr.mxu0 0.0
    %658 = vmatpush1.msra.mxu0 %v198
    %659 = vmatprep.subr.mxu0 0.0
    %660 = vmatpush1.msra.mxu0 %v199
    %661 = vmatprep.subr.mxu0 0.0
    %662 = vmatpush1.msra.mxu0 %v200
    %663 = vmatprep.subr.mxu0 0.0
    %664 = vmatpush1.msra.mxu0 %v201
    %665 = vmatprep.subr.mxu0 0.0
    %666 = vmatpush1.msra.mxu0 %v202
    %667 = vmatprep.subr.mxu0 0.0
    %668 = vmatpush1.msra.mxu0 %v203
    %669 = vmatprep.subr.mxu0 0.0
    %670 = vmatpush1.msra.mxu0 %v204
    %671 = vmatprep.subr.mxu0 0.0
    %672 = vmatpush1.msra.mxu0 %v205
    %673 = vmatprep.subr.mxu0 0.0
    %674 = vmatpush1.msra.mxu0 %v206
    %675 = vmatprep.subr.mxu0 0.0
    %676 = vmatpush1.msra.mxu0 %v207
    %677 = vmatprep.subr.mxu0 0.0
    %678 = vmatpush1.msra.mxu0 %v208
    %679 = vmatprep.subr.mxu0 0.0
    %680 = vmatpush1.msra.mxu0 %v209
    %681 = vmatprep.subr.mxu0 0.0
    %682 = vmatpush1.msra.mxu0 %v210
    %683 = vmatprep.subr.mxu0 0.0
    %684 = vmatpush1.msra.mxu0 %v211
    %685 = vmatprep.subr.mxu0 0.0
    %686 = vmatpush1.msra.mxu0 %v212
    %687 = vmatprep.subr.mxu0 0.0
    %688 = vmatpush1.msra.mxu0 %v213
    %689 = vmatprep.subr.mxu0 0.0
    %690 = vmatpush1.msra.mxu0 %v214
    %691 = vmatprep.subr.mxu0 0.0
    %692 = vmatpush1.msra.mxu0 %v215
    %693 = vmatprep.subr.mxu0 0.0
    %694 = vmatpush1.msra.mxu0 %v216
    %695 = vmatprep.subr.mxu0 0.0
    %696 = vmatpush1.msra.mxu0 %v217
    %697 = vmatprep.subr.mxu0 0.0
    %698 = vmatpush1.msra.mxu0 %v218
    %699 = vmatprep.mubr.f32.mxu0 %v471
    %700 = vmatmul.mubr.f32.gmra.mrb[0].mxu0 %v470
    %v701 = vpop.f32.mrb[0].mxu0
    %v702 = vadd.f32 %v627, %v701
    %v703 = vpop.f32.mrb[0].mxu0
    %704 = vmatprep.mubr.f32.mxu0 %v477
    %705 = vmatmul.mubr.f32.gmra.mrb[0].mxu0 %v476
    %v706 = vpop.f32.mrb[0].mxu0
    %v707 = vadd.f32 %v632, %v706
    %v708 = vpop.f32.mrb[0].mxu0
    %709 = vdwg.mxu0
    %710 = vst.msk [vmem:[#allocation4] sm:$0xff] %vm463, %v702
    %711 = vst.msk [vmem:[#allocation4 + $0x8] sm:$0xff] %vm463, %v707
    // Predicated region
    $region26: #{tpu_custom_call.1} parent=1 // pred_check
      _
    $region27: #{tpu_custom_call.1} parent=1 // pred_check_branch
      %713 = sbr.rel (0) target = $region29
    $region28: #{tpu_custom_call.1} parent=1 // pred_region
      %s715 = ssub.s32 256, 256
      %716 = vsyncadd [#allocation3], %s715
      %s717 = sshll.u32 [#allocation2], 4
      %s718 = int_to_ptr.vmem [resolvable:$true] %s717
      %723 = dma.vmem_to_hbm [thread:$0]  %s718, 256, %s6, [#allocation3], 128, 128, 8
    $region29: #{tpu_custom_call.1} parent=1 // pred_fallthru
      _
    // Predicated region
    $region30: #{tpu_custom_call.1} parent=1 // pred_check
      _
    $region31: #{tpu_custom_call.1} parent=1 // pred_check_branch
      %725 = sbr.rel (0) target = $region33
    $region32: #{tpu_custom_call.1} parent=1 // pred_region
      %s727 = ssub.s32 256, 256
      %728 = vsyncadd [#allocation5], %s727
      %s729 = sshll.u32 [#allocation4], 4
      %s730 = int_to_ptr.vmem [resolvable:$true] %s729
      %735 = dma.vmem_to_hbm [thread:$0]  %s730, 256, %s7, [#allocation5], 128, 128, 8
    $region33: #{tpu_custom_call.1} parent=1 // pred_fallthru
      _
    // Predicated region
    $region34: #{tpu_custom_call.1} parent=1 // pred_check
      _
    $region35: #{tpu_custom_call.1} parent=1 // pred_check_branch
      %737 = sbr.rel (0) target = $region37
    $region36: #{tpu_custom_call.1} parent=1 // pred_region
      %738 = dma.done [#allocation3], 256
    $region37: #{tpu_custom_call.1} parent=1 // pred_fallthru
      _
    // Predicated region
    $region38: #{tpu_custom_call.1} parent=1 // pred_check
      _
    $region39: #{tpu_custom_call.1} parent=1 // pred_check_branch
      %740 = sbr.rel (0) target = $region41
    $region40: #{tpu_custom_call.1} parent=1 // pred_region
      %741 = dma.done [#allocation5], 256
    $region41: #{tpu_custom_call.1} parent=1 // pred_fallthru
      _
    %742 = vsyncpa [#allocation3], 1
    %743 = vsyncpa [#allocation5], 1

</llo_original>
